<compile_context>
chip_gen: v7x
topology: tpu7x:2x2x1
jax: 0.10.0
libtpu: 0.0.40
codegen_flags: <defaults>
</compile_context>

<pallas_src>
import jax
import jax.numpy as jnp
from jax import lax
from jax.experimental import pallas as pl
from jax.experimental.pallas import tpu as pltpu

KERNEL = 3  # 3x3 window, stride 1, padding 1


def _pad_value(dtype):
    dtype = jnp.dtype(dtype)
    if jnp.issubdtype(dtype, jnp.floating):
        return -jnp.inf
    return jnp.iinfo(dtype).min  # integer inputs: use dtype min instead of -inf


def _shift_max3(a, axis, pad_val):
    """Elementwise max of `a` and its +1 / -1 shifted versions along `axis`,
    treating out-of-range neighbors as `pad_val` (i.e. padding=1 semantics)."""
    n = a.shape[axis]
    if n == 1:
        return a  # both neighbors are padding -> max is the element itself
    edge_shape = list(a.shape)
    edge_shape[axis] = 1
    edge = jnp.full(tuple(edge_shape), pad_val, dtype=a.dtype)
    nxt = jnp.concatenate([lax.slice_in_dim(a, 1, n, axis=axis), edge], axis=axis)
    prv = jnp.concatenate([edge, lax.slice_in_dim(a, 0, n - 1, axis=axis)], axis=axis)
    return jnp.maximum(a, jnp.maximum(nxt, prv))


def _maxpool_kernel(x_ref, o_ref):
    # x_ref / o_ref : (BC, H, W)
    pad_val = _pad_value(o_ref.dtype)
    x = x_ref[...]
    # Separable 3x3 max: horizontal (lane axis) pass, then vertical (sublane axis) pass.
    m = _shift_max3(x, axis=2, pad_val=pad_val)
    m = _shift_max3(m, axis=1, pad_val=pad_val)
    o_ref[...] = m.astype(o_ref.dtype)


def _round_up(v, m):
    return (v + m - 1) // m * m


def _pick_block_planes(B, H, W, itemsize):
    """How many (n, c) planes to process per grid step."""
    # VMEM-resident bytes per plane, accounting for (8, 128) tile padding of the last
    # two dims; budget = 2x input + 2x output (double buffered).
    plane_vmem = _round_up(H, 8) * _round_up(W, 128) * itemsize
    per_plane = 4 * plane_vmem
    budget = 12 * 1024 * 1024  # stays under the default scoped-VMEM limit on v5e/v6e/v7x
    bc = max(1, min(B, budget // per_plane))
    # Keep at least 2 grid steps when possible so pipelining / v7x's two TensorCores
    # both have work.
    if bc >= B and B > 1:
        bc = max(1, B // 2)
    # Round down to a divisor of B to avoid ragged edge blocks.
    while B % bc != 0:
        bc -= 1
    return bc


def maxpool2d(x, block_planes=None):
    """x: (N, C, H, W). MaxPool2d(kernel_size=3, stride=1, padding=1, ceil_mode=True)."""
    N, C, H, W = x.shape
    B = N * C
    xf = x.reshape(B, H, W)
    BC = block_planes or _pick_block_planes(B, H, W, x.dtype.itemsize)
    grid = (B // BC,)

    out = pl.pallas_call(
        _maxpool_kernel,
        out_shape=jax.ShapeDtypeStruct((B, H, W), x.dtype),
        grid_spec=pltpu.PrefetchScalarGridSpec(
            num_scalar_prefetch=0,
            grid=grid,
            in_specs=[pl.BlockSpec((BC, H, W), lambda i: (i, 0, 0))],
            out_specs=pl.BlockSpec((BC, H, W), lambda i: (i, 0, 0)),
        ),
        compiler_params=pltpu.CompilerParams(
            dimension_semantics=("parallel",),
        ),
    )(xf)
    return out.reshape(N, C, H, W)


def _reference_maxpool(x):
    # Pure-JAX reference: pad with dtype-min/-inf + 3x3 sliding max, stride 1.
    N, C, H, W = x.shape
    pad_val = _pad_value(x.dtype)
    xp = jnp.pad(x, ((0, 0), (0, 0), (1, 1), (1, 1)), constant_values=pad_val)
    acc = xp[:, :, 1:1 + H, 1:1 + W]
    for dh in range(KERNEL):
        for dw in range(KERNEL):
            if dh == 1 and dw == 1:
                continue
            acc = jnp.maximum(acc, xp[:, :, dh:dh + H, dw:dw + W])
    return acc


if __name__ == "__main__":
    key = jax.random.PRNGKey(0)
    x = jax.random.normal(key, (2, 4, 16, 16), dtype=jnp.float32)

    out = jax.block_until_ready(maxpool2d(x))
    ref = _reference_maxpool(x)
    assert out.shape == (2, 4, 16, 16), out.shape
    assert jnp.allclose(out, ref), "mismatch vs reference"

    # Extra shape exercising a plane-batch that does not cover all planes in one step.
    x2 = jax.random.normal(jax.random.PRNGKey(1), (3, 5, 16, 16), dtype=jnp.float32)
    out2 = jax.block_until_ready(maxpool2d(x2))
    assert jnp.allclose(out2, _reference_maxpool(x2)), "mismatch vs reference (shape 2)"

    print("KERNEL_OK")
</pallas_src>

<mosaic_0001>
module attributes {stable_mosaic.version = 11 : i64} {
  func.func @_maxpool_kernel(%arg0: i32, %arg1: memref<4x16x16xf32, #tpu.memory_space<vmem>>, %arg2: memref<4x16x16xf32, #tpu.memory_space<vmem>>) attributes {dimension_semantics = [#tpu.dimension_semantics<parallel>], iteration_bounds = array<i64: 2>, scalar_prefetch = 0 : i64, scratch_operands = 0 : i64, tpu.core_type = #tpu.core_type<tc>, window_params = [{transform_indices = @transform_0, window_bounds = array<i64: 4, 16, 16>}, {transform_indices = @transform_1, window_bounds = array<i64: 4, 16, 16>}]} {
    %c0 = arith.constant 0 : index
    %c0_0 = arith.constant 0 : index
    %c0_1 = arith.constant 0 : index
    %0 = vector.load %arg1[%c0, %c0_0, %c0_1] : memref<4x16x16xf32, #tpu.memory_space<vmem>>, vector<4x16x16xf32>
    %cst = arith.constant 0xFF800000 : f32
    %1 = vector.broadcast %cst : f32 to vector<4x16x1xf32>
    %2 = vector.extract_strided_slice %0 {offsets = [0, 0, 1], sizes = [4, 16, 15], strides = [1, 1, 1]} : vector<4x16x16xf32> to vector<4x16x15xf32>
    %3 = tpu.concatenate %2, %1 in 2 : vector<4x16x15xf32>, vector<4x16x1xf32> -> vector<4x16x16xf32>
    %4 = vector.extract_strided_slice %0 {offsets = [0, 0, 0], sizes = [4, 16, 15], strides = [1, 1, 1]} : vector<4x16x16xf32> to vector<4x16x15xf32>
    %5 = tpu.concatenate %1, %4 in 2 : vector<4x16x1xf32>, vector<4x16x15xf32> -> vector<4x16x16xf32>
    %6 = arith.maximumf %3, %5 : vector<4x16x16xf32>
    %7 = arith.maximumf %0, %6 : vector<4x16x16xf32>
    %cst_2 = arith.constant 0xFF800000 : f32
    %8 = vector.broadcast %cst_2 : f32 to vector<4x1x16xf32>
    %9 = vector.extract_strided_slice %7 {offsets = [0, 1, 0], sizes = [4, 15, 16], strides = [1, 1, 1]} : vector<4x16x16xf32> to vector<4x15x16xf32>
    %10 = tpu.concatenate %9, %8 in 1 : vector<4x15x16xf32>, vector<4x1x16xf32> -> vector<4x16x16xf32>
    %11 = vector.extract_strided_slice %7 {offsets = [0, 0, 0], sizes = [4, 15, 16], strides = [1, 1, 1]} : vector<4x16x16xf32> to vector<4x15x16xf32>
    %12 = tpu.concatenate %8, %11 in 1 : vector<4x1x16xf32>, vector<4x15x16xf32> -> vector<4x16x16xf32>
    %13 = arith.maximumf %10, %12 : vector<4x16x16xf32>
    %14 = arith.maximumf %7, %13 : vector<4x16x16xf32>
    %c0_3 = arith.constant 0 : index
    %c0_4 = arith.constant 0 : index
    %c0_5 = arith.constant 0 : index
    %15 = vector.load %arg2[%c0_3, %c0_4, %c0_5] : memref<4x16x16xf32, #tpu.memory_space<vmem>>, vector<4x16x16xf32>
    tpu.vector_store %arg2[%c0_3, %c0_4, %c0_5], %14 {strides = array<i32>} : memref<4x16x16xf32, #tpu.memory_space<vmem>>, vector<4x16x16xf32>,
    return
  }
  func.func @transform_0(%arg0: i32) -> (i32, i32, i32) {
    %c0_i32 = arith.constant 0 : i32
    %c0_i32_0 = arith.constant 0 : i32
    %c0_i32_1 = arith.constant 0 : i32
    return %arg0, %c0_i32, %c0_i32_0 : i32, i32, i32
  }
  func.func @transform_1(%arg0: i32) -> (i32, i32, i32) {
    %c0_i32 = arith.constant 0 : i32
    %c0_i32_0 = arith.constant 0 : i32
    %c0_i32_1 = arith.constant 0 : i32
    return %arg0, %c0_i32, %c0_i32_0 : i32, i32, i32
  }
}

</mosaic_0001>

<llo_original>
// kernel: tpu_custom_call.1
$region0: #{tpu_custom_call.1}
  #allocation0 [shape = 'u32[]', space=smem, size = 0x4, offset = 0x4, fixed_abs, tag = 'smem constant byte address 0x4 - core index']
  #allocation1 [shape = 'u32[144,128]{1,0:T(1,128)}', space=vmem, size = 0x12000, scoped, tag = 'internal scratch']
  %s0 = inlined_call_operand.hbm [shape: f32[8,16,16], index: 0, kind: input, shape index: {}]
  %s1 = inlined_call_operand.hbm [shape: f32[8,16,16], index: 1, kind: output, shape index: {}]
  %s2 = sld [smem:[#allocation0]]
  $region41: #{tpu_custom_call.1} parent=0
    _
  %s4 = ssub.s32 1, %s2
  %s5 = scalar_select 0, %s4, %s2
  $region1: #{tpu_custom_call.1} parent=0
    #allocation2 [shape = 'u8[65536]{0}', space=vmem, size = 0x10000, scoped, tag = 'input window, operand 0']
    #allocation3 [shape = 's32[2]{0}', space=sflag, size = 0x8, scoped, tag = 'scoped memory for tpu_custom_call.1']
    #allocation4 [shape = 's32[2]{0}', space=sflag, size = 0x8, scoped, tag = 'scoped memory for tpu_custom_call.1']
    #allocation5 [shape = 'u8[65536]{0}', space=vmem, size = 0x10000, scoped, tag = 'output window, operand 0']
    %6 = vsyncpa [#allocation3], 0
    %s7 = scalar_lea.sflag [#allocation3], 1
    %8 = vsyncpa %s7, 0
    %9 = vsyncpa [#allocation4], 0
    %s10 = scalar_lea.sflag [#allocation4], 1
    %11 = vsyncpa %s10, 0
    loop: start=0, step=1, limit=4
    $region2: #{tpu_custom_call.1} parent=1 // loop_pre_header
      _
    $region3: #{tpu_custom_call.1} parent=1 // loop_header
      %s13 = sphi 0, %s17
      %p14 = scmp.ge.s32.totalorder %s13, 4
      %s23 = sphi 0, %s25
      %s26 = sphi 0, %s23
      %s27 = sphi 0, %s26
      %s43 = sphi 0, %s27
      %s49 = sphi 0, %s51
      %s52 = sphi 0, %s49
      %s53 = sphi 0, %s52
      %s69 = sphi 0, %s53
    $region4: #{tpu_custom_call.1} parent=1 // loop_header_branch
      %16 = sbr.rel (%p14) target = $region8
    $region5: #{tpu_custom_call.1} parent=1 // loop_body
      %s18 = ssub.s32 %s13, 1
      %s19 = ssub.s32 %s13, 2
      %s20 = sadd.s32 %s13, 1
      %s21 = ssub.s32 %s13, %s20
      %p22 = scmp.eq.s32.totalorder %s21, 0
      %s24 = sadd.s32 %s23, 1
      %s25 = scalar_select %p22, %s23, %s24
      %p28 = pneg %p22
      %p29 = scmp.eq.s32.totalorder %s13, 1
      %p30 = por %p28, %p29
      %p31 = scmp.ne.s32.totalorder %s23, %s26
      %p32 = scmp.eq.s32.totalorder %s13, 0
      %p33 = por %p31, %p32
      %p34 = scmp.ne.s32.totalorder %s23, %s26
      %p35 = scmp.eq.s32.totalorder %s18, 1
      %p36 = por %p34, %p35
      %p37 = scmp.ne.s32.totalorder %s26, %s27
      %p38 = scmp.eq.s32.totalorder %s18, 0
      %p39 = por %p37, %p38
      %p40 = scmp.ne.s32.totalorder %s26, %s27
      %p41 = scmp.eq.s32.totalorder %s19, 1
      %p42 = por %p40, %p41
      %p44 = scmp.ne.s32.totalorder %s27, %s43
      %p45 = scmp.eq.s32.totalorder %s19, 0
      %p46 = por %p44, %p45
      %s47 = ssub.s32 %s13, %s20
      %p48 = scmp.eq.s32.totalorder %s47, 0
      %s50 = sadd.s32 %s49, 1
      %s51 = scalar_select %p48, %s49, %s50
      %p54 = pneg %p48
      %p55 = scmp.eq.s32.totalorder %s13, 1
      %p56 = por %p54, %p55
      %p57 = scmp.ne.s32.totalorder %s49, %s52
      %p58 = scmp.eq.s32.totalorder %s13, 0
      %p59 = por %p57, %p58
      %p60 = scmp.ne.s32.totalorder %s49, %s52
      %p61 = scmp.eq.s32.totalorder %s18, 1
      %p62 = por %p60, %p61
      %p63 = scmp.ne.s32.totalorder %s52, %s53
      %p64 = scmp.eq.s32.totalorder %s18, 0
      %p65 = por %p63, %p64
      %p66 = scmp.ne.s32.totalorder %s52, %s53
      %p67 = scmp.eq.s32.totalorder %s19, 1
      %p68 = por %p66, %p67
      %p70 = scmp.ne.s32.totalorder %s53, %s69
      %p71 = scmp.eq.s32.totalorder %s19, 0
      %p72 = por %p70, %p71
      %p73 = scmp.le.s32.totalorder 1, %s13
      %p74 = scmp.lt.s32.totalorder %s13, 3
      %p75 = pnand %p73, %p74
      %p76 = pneg %p75
      // Predicated region
      $region9: #{tpu_custom_call.1} parent=5 // pred_check
        _
      $region10: #{tpu_custom_call.1} parent=5 // pred_check_branch
        %78 = sbr.rel (%p75) target = $region12
      $region11: #{tpu_custom_call.1} parent=5 // pred_region
        %s79 = ssub.s32 %s13, 1
      $region12: #{tpu_custom_call.1} parent=5 // pred_fallthru
        _
      %p80 = scmp.lt.s32.totalorder %s13, 2
      // Predicated region
      $region13: #{tpu_custom_call.1} parent=5 // pred_check
        %p81 = pneg %p80
      $region14: #{tpu_custom_call.1} parent=5 // pred_check_branch
        %83 = sbr.rel (%p81) target = $region16
      $region15: #{tpu_custom_call.1} parent=5 // pred_region
        // Predicated region
        $region17: #{tpu_custom_call.1} parent=15 // pred_check
          %p84 = pneg %p33
        $region18: #{tpu_custom_call.1} parent=15 // pred_check_branch
          %86 = sbr.rel (%p84) target = $region20
        $region19: #{tpu_custom_call.1} parent=15 // pred_region
          %s87 = sand.u32 %s23, 1
          %s88 = scalar_lea.sflag [#allocation3], %s87
          %s89 = sand.u32 %s23, 1
          %s90 = smul.addr %s89, 64
          %s91 = scalar_lea.vmem [#allocation2], %s90
          %s92 = smul.u32 4, %s13
          %s94 = ssub.s32 1024, 1024
          %95 = vsyncadd %s88, %s94
          %s96 = smul.addr %s92, 2
          %s97 = smul.addr %s96, 128
          %s98 = scalar_lea.hbm %s0, %s97
          %s99 = sshll.u32 %s91, 4
          %s100 = int_to_ptr.vmem [resolvable:$true] %s99
          %105 = dma.hbm_to_vmem [thread:$0]  %s98, 1024, %s100, %s88, 128, 128, 8
        $region20: #{tpu_custom_call.1} parent=15 // pred_fallthru
          _
      $region16: #{tpu_custom_call.1} parent=5 // pred_fallthru
        _
      %p106 = scmp.le.s32.totalorder 1, %s13
      %p107 = scmp.lt.s32.totalorder %s13, 3
      %p108 = pnand %p106, %p107
      %p109 = pneg %p108
      // Predicated region
      $region21: #{tpu_custom_call.1} parent=5 // pred_check
        _
      $region22: #{tpu_custom_call.1} parent=5 // pred_check_branch
        %111 = sbr.rel (%p108) target = $region24
      $region23: #{tpu_custom_call.1} parent=5 // pred_region
        %s112 = ssub.s32 %s13, 1
        %s113 = sand.u32 %s26, 1
        %s114 = scalar_lea.sflag [#allocation3], %s113
        %s115 = sand.u32 %s26, 1
        %s116 = smul.addr %s115, 64
        %s117 = scalar_lea.vmem [#allocation2], %s116
        // Predicated region
        $region25: #{tpu_custom_call.1} parent=23 // pred_check
          %p118 = pneg %p39
        $region26: #{tpu_custom_call.1} parent=23 // pred_check_branch
          %120 = sbr.rel (%p118) target = $region28
        $region27: #{tpu_custom_call.1} parent=23 // pred_region
          %121 = dma.done %s114, 1024
        $region28: #{tpu_custom_call.1} parent=23 // pred_fallthru
          _
        %s122 = sand.u32 %s26, 1
        %s123 = scalar_lea.sflag [#allocation3], %s122
        %s124 = sand.u32 %s26, 1
        %s125 = smul.addr %s124, 64
        %s126 = scalar_lea.vmem [#allocation2], %s125
        %p127 = pneg %p39
        %p128 = pneg %p36
        %p129 = pneg %p65
        %p130 = pneg %p62
        %s131 = sand.u32 %s52, 1
        %s132 = scalar_lea.sflag [#allocation4], %s131
        %s133 = sand.u32 %s52, 1
        %s134 = smul.addr %s133, 64
        %s135 = scalar_lea.vmem [#allocation5], %s134
        %s136 = smul.u32 4, %s18
        %s137 = smul.u32 4, %s18
        %v138 = vld [vmem:[%s117] sm:$0xff]
        %v139 = vld [vmem:[%s117 + $0x8] sm:$0xff]
        %v140 = vld [vmem:[%s117 + $0x10] sm:$0xff]
        %v141 = vld [vmem:[%s117 + $0x18] sm:$0xff]
        %v142 = vld [vmem:[%s117 + $0x20] sm:$0xff]
        %v143 = vld [vmem:[%s117 + $0x28] sm:$0xff]
        %v144 = vld [vmem:[%s117 + $0x30] sm:$0xff]
        %v145 = vld [vmem:[%s117 + $0x38] sm:$0xff]
        %154 = vrot.lane.b32.xlu0 %v138, 127
        %v155 = vpop.permute.xlu0 %154
        %156 = vrot.lane.b32.xlu0 %v139, 127
        %v157 = vpop.permute.xlu0 %156
        %158 = vrot.lane.b32.xlu0 %v140, 127
        %v159 = vpop.permute.xlu0 %158
        %160 = vrot.lane.b32.xlu0 %v141, 127
        %v161 = vpop.permute.xlu0 %160
        %162 = vrot.lane.b32.xlu0 %v142, 127
        %v163 = vpop.permute.xlu0 %162
        %164 = vrot.lane.b32.xlu0 %v143, 127
        %v165 = vpop.permute.xlu0 %164
        %166 = vrot.lane.b32.xlu0 %v144, 127
        %v167 = vpop.permute.xlu0 %166
        %168 = vrot.lane.b32.xlu0 %v145, 127
        %v169 = vpop.permute.xlu0 %168
        %vm178 = vcmask 121856
        %v179 = vsel %vm178, %v155, -inf
        %v180 = vsel %vm178, %v157, -inf
        %v181 = vsel %vm178, %v159, -inf
        %v182 = vsel %vm178, %v161, -inf
        %v183 = vsel %vm178, %v163, -inf
        %v184 = vsel %vm178, %v165, -inf
        %v185 = vsel %vm178, %v167, -inf
        %v186 = vsel %vm178, %v169, -inf
        %187 = vrot.lane.b32.xlu0 %v138, 1
        %v188 = vpop.permute.xlu0 %187
        %189 = vrot.lane.b32.xlu0 %v139, 1
        %v190 = vpop.permute.xlu0 %189
        %191 = vrot.lane.b32.xlu0 %v140, 1
        %v192 = vpop.permute.xlu0 %191
        %193 = vrot.lane.b32.xlu0 %v141, 1
        %v194 = vpop.permute.xlu0 %193
        %195 = vrot.lane.b32.xlu0 %v142, 1
        %v196 = vpop.permute.xlu0 %195
        %197 = vrot.lane.b32.xlu0 %v143, 1
        %v198 = vpop.permute.xlu0 %197
        %199 = vrot.lane.b32.xlu0 %v144, 1
        %v200 = vpop.permute.xlu0 %199
        %201 = vrot.lane.b32.xlu0 %v145, 1
        %v202 = vpop.permute.xlu0 %201
        %vm211 = vcmask 7168
        %v212 = vsel %vm211, -inf, %v188
        %v213 = vsel %vm211, -inf, %v190
        %v214 = vsel %vm211, -inf, %v192
        %v215 = vsel %vm211, -inf, %v194
        %v216 = vsel %vm211, -inf, %v196
        %v217 = vsel %vm211, -inf, %v198
        %v218 = vsel %vm211, -inf, %v200
        %v219 = vsel %vm211, -inf, %v202
        %v220 = vmax.f32 %v179, %v212
        %v221 = vmax.f32 %v180, %v213
        %v222 = vmax.f32 %v181, %v214
        %v223 = vmax.f32 %v182, %v215
        %v224 = vmax.f32 %v183, %v216
        %v225 = vmax.f32 %v184, %v217
        %v226 = vmax.f32 %v185, %v218
        %v227 = vmax.f32 %v186, %v219
        %v228 = vmax.f32 %v138, %v220
        %v229 = vmax.f32 %v139, %v221
        %v230 = vmax.f32 %v140, %v222
        %v231 = vmax.f32 %v141, %v223
        %v232 = vmax.f32 %v142, %v224
        %v233 = vmax.f32 %v143, %v225
        %v234 = vmax.f32 %v144, %v226
        %v235 = vmax.f32 %v145, %v227
        %vm244 = vcmask 1046528
        %v245 = vrot.slane %v228, 1
        %v246 = vrot.slane %v229, 1
        %v247 = vsel %vm244, %v245, %v246
        %v248 = vrot.slane %v230, 1
        %v249 = vrot.slane %v231, 1
        %v250 = vsel %vm244, %v248, %v249
        %v251 = vrot.slane %v232, 1
        %v252 = vrot.slane %v233, 1
        %v253 = vsel %vm244, %v251, %v252
        %v254 = vrot.slane %v234, 1
        %v255 = vrot.slane %v235, 1
        %v256 = vsel %vm244, %v254, %v255
        %v265 = vsel %vm244, %v246, -inf
        %v266 = vsel %vm244, %v249, -inf
        %v267 = vsel %vm244, %v252, -inf
        %v268 = vsel %vm244, %v255, -inf
        %vm269 = vcmask 1040384
        %v270 = vrot.slane %v228, 7
        %v271 = vrot.slane %v229, 7
        %v272 = vsel %vm269, %v270, %v271
        %v273 = vrot.slane %v230, 7
        %v274 = vrot.slane %v231, 7
        %v275 = vsel %vm269, %v273, %v274
        %v276 = vrot.slane %v232, 7
        %v277 = vrot.slane %v233, 7
        %v278 = vsel %vm269, %v276, %v277
        %v279 = vrot.slane %v234, 7
        %v280 = vrot.slane %v235, 7
        %v281 = vsel %vm269, %v279, %v280
        %v290 = vsel %vm269, -inf, %v270
        %v291 = vsel %vm269, -inf, %v273
        %v292 = vsel %vm269, -inf, %v276
        %v293 = vsel %vm269, -inf, %v279
        %v294 = vmax.f32 %v247, %v290
        %v295 = vmax.f32 %v265, %v272
        %v296 = vmax.f32 %v250, %v291
        %v297 = vmax.f32 %v266, %v275
        %v298 = vmax.f32 %v253, %v292
        %v299 = vmax.f32 %v267, %v278
        %v300 = vmax.f32 %v256, %v293
        %v301 = vmax.f32 %v268, %v281
        %v302 = vmax.f32 %v228, %v294
        %v303 = vmax.f32 %v229, %v295
        %v304 = vmax.f32 %v230, %v296
        %v305 = vmax.f32 %v231, %v297
        %v306 = vmax.f32 %v232, %v298
        %v307 = vmax.f32 %v233, %v299
        %v308 = vmax.f32 %v234, %v300
        %v309 = vmax.f32 %v235, %v301
        %vm310 = vcmask 130048
        %311 = vst.msk [vmem:[%s135] sm:$0xff] %vm310, %v302
        %312 = vst.msk [vmem:[%s135 + $0x8] sm:$0xff] %vm310, %v303
        %313 = vst.msk [vmem:[%s135 + $0x10] sm:$0xff] %vm310, %v304
        %314 = vst.msk [vmem:[%s135 + $0x18] sm:$0xff] %vm310, %v305
        %315 = vst.msk [vmem:[%s135 + $0x20] sm:$0xff] %vm310, %v306
        %316 = vst.msk [vmem:[%s135 + $0x28] sm:$0xff] %vm310, %v307
        %317 = vst.msk [vmem:[%s135 + $0x30] sm:$0xff] %vm310, %v308
        %318 = vst.msk [vmem:[%s135 + $0x38] sm:$0xff] %vm310, %v309
        %s319 = sand.u32 %s52, 1
        %s320 = scalar_lea.sflag [#allocation4], %s319
        %s321 = sand.u32 %s52, 1
        %s322 = smul.addr %s321, 64
        %s323 = scalar_lea.vmem [#allocation5], %s322
        // Predicated region
        $region29: #{tpu_custom_call.1} parent=23 // pred_check
          %p324 = pneg %p62
        $region30: #{tpu_custom_call.1} parent=23 // pred_check_branch
          %326 = sbr.rel (%p324) target = $region32
        $region31: #{tpu_custom_call.1} parent=23 // pred_region
          %s327 = smul.u32 4, %s18
          %s329 = ssub.s32 1024, 1024
          %330 = vsyncadd %s320, %s329
          %s331 = smul.addr %s327, 2
          %s332 = smul.addr %s331, 128
          %s333 = scalar_lea.hbm %s1, %s332
          %s334 = sshll.u32 %s323, 4
          %s335 = int_to_ptr.vmem [resolvable:$true] %s334
          %340 = dma.vmem_to_hbm [thread:$0]  %s335, 1024, %s333, %s320, 128, 128, 8
        $region32: #{tpu_custom_call.1} parent=23 // pred_fallthru
          _
      $region24: #{tpu_custom_call.1} parent=5 // pred_fallthru
        _
      %p341 = scmp.le.s32.totalorder 2, %s13
      // Predicated region
      $region33: #{tpu_custom_call.1} parent=5 // pred_check
        %p342 = pneg %p341
      $region34: #{tpu_custom_call.1} parent=5 // pred_check_branch
        %344 = sbr.rel (%p342) target = $region36
      $region35: #{tpu_custom_call.1} parent=5 // pred_region
        %s345 = ssub.s32 %s13, 2
        // Predicated region
        $region37: #{tpu_custom_call.1} parent=35 // pred_check
          %p346 = pneg %p68
        $region38: #{tpu_custom_call.1} parent=35 // pred_check_branch
          %348 = sbr.rel (%p346) target = $region40
        $region39: #{tpu_custom_call.1} parent=35 // pred_region
          %s349 = sand.u32 %s53, 1
          %s350 = scalar_lea.sflag [#allocation4], %s349
          %s351 = sand.u32 %s53, 1
          %s352 = smul.addr %s351, 64
          %s353 = scalar_lea.vmem [#allocation5], %s352
          %354 = dma.done %s350, 1024
        $region40: #{tpu_custom_call.1} parent=35 // pred_fallthru
          _
      $region36: #{tpu_custom_call.1} parent=5 // pred_fallthru
        _
    $region6: #{tpu_custom_call.1} parent=1 // loop_footer
      %s17 = sadd.s32 1, %s13
    $region7: #{tpu_custom_call.1} parent=1 // loop_footer_branch
      %12 = sbr.rel target = $region3
    $region8: #{tpu_custom_call.1} parent=1 // loop_exit
      _
    %355 = vsyncpa [#allocation3], 1
    %s356 = scalar_lea.sflag [#allocation3], 1
    %357 = vsyncpa %s356, 1
    %358 = vsyncpa [#allocation4], 1
    %s359 = scalar_lea.sflag [#allocation4], 1
    %360 = vsyncpa %s359, 1

</llo_original>
